<compile_context>
chip_gen: v7x
topology: tpu7x:2x2x1
jax: 0.10.0
libtpu: 0.0.40
codegen_flags: <defaults>
</compile_context>

<pallas_src>
import jax
import jax.numpy as jnp
from jax.experimental import pallas as pl
from jax.experimental.pallas import tpu as pltpu

_MAX_LANE = 2048  # cap on lane width (must stay a multiple of 128)


def _h264_quant_kernel(x_ref, o_ref):
    # uint8 round-trip: values are clipped to [0,1] so floor == uint8 truncation.
    # out = x + (loaded - x) == loaded  (straight-through value).
    x = x_ref[...].astype(jnp.float32)
    loaded = jnp.floor(jnp.clip(x, 0.0, 1.0) * 255.0) * (1.0 / 255.0)
    o_ref[...] = loaded.astype(o_ref.dtype)


def _round_up(v, m):
    return (v + m - 1) // m * m


def _pick_lane(total):
    """Largest multiple of 128 (<= _MAX_LANE) that divides `total`, else None."""
    if total % 128 != 0:
        return None
    base = total // 128
    k = min(base, _MAX_LANE // 128)
    while k > 1 and base % k != 0:
        k -= 1
    return 128 * k


def _tile_config():
    """(target_tile_bytes, is_multi_tensorcore, vmem_limit_bytes) per chip gen."""
    try:
        kind = jax.devices()[0].device_kind.lower()
    except Exception:  # pragma: no cover - be safe on exotic backends
        kind = ""
    if "v7" in kind:
        # 8 MiB tiles: double-buffered in+out = 32 MiB, so bump the scoped
        # VMEM limit (64 MiB physical on v7x). Two TensorCores -> force >=2 steps.
        return 8 << 20, True, 48 << 20
    if "v6" in kind:
        # 16 MiB double-buffered total, well under the 32 MiB scoped default.
        return 4 << 20, False, None
    # v5e / older / unknown: 2 MiB tiles fit the 16 MiB default comfortably and
    # already keep per-step overhead <7% of the HBM-bound step time.
    return 2 << 20, False, None


def _h264_quant(x: jax.Array) -> jax.Array:
    """Apply the uint8 quantization round-trip to an arbitrary-shape array."""
    orig_shape = x.shape
    dtype = x.dtype
    total = x.size
    if total == 0:
        return x

    itemsize = jnp.dtype(dtype).itemsize
    # Sub-32-bit dtypes pack along sublanes: (8,128) f32, (16,128) bf16, (32,128) int8.
    sublane_mult = max(8, 32 // itemsize)

    flat = x.reshape(-1)
    lane = _pick_lane(total)
    padded_total = total
    if lane is None:
        # Fallback: no 128-factor exists, pad minimally to a 128-wide slab.
        lane = 128
        padded_total = _round_up(total, lane)
        flat = jnp.pad(flat, (0, padded_total - total))
    rows = padded_total // lane
    x2d = flat.reshape(rows, lane)

    tile_bytes, is_multi_tc, vmem_limit = _tile_config()
    max_block_rows = max(
        sublane_mult,
        (tile_bytes // (lane * itemsize)) // sublane_mult * sublane_mult,
    )
    # Either a single block spanning the full row extent (always legal), or a
    # sublane-aligned block with a masked ragged last block (no row padding).
    block_rows = rows if rows <= max_block_rows else max_block_rows
    if is_multi_tc and rows > sublane_mult:
        # Guarantee >= 2 grid steps so both TensorCores get work on v7x.
        split = _round_up(pl.cdiv(rows, 2), sublane_mult)
        if split < block_rows:
            block_rows = split

    grid = (pl.cdiv(rows, block_rows),)

    out2d = pl.pallas_call(
        _h264_quant_kernel,
        out_shape=jax.ShapeDtypeStruct((rows, lane), dtype),
        grid=grid,
        in_specs=[pl.BlockSpec((block_rows, lane), lambda i: (i, 0))],
        out_specs=pl.BlockSpec((block_rows, lane), lambda i: (i, 0)),
        compiler_params=pltpu.CompilerParams(
            dimension_semantics=("parallel",),
            vmem_limit_bytes=vmem_limit),
        cost_estimate=pl.CostEstimate(
            flops=5 * rows * lane,
            transcendentals=0,
            bytes_accessed=2 * rows * lane * itemsize),
    )(x2d)

    out = out2d.reshape(-1)
    if padded_total != total:
        out = out[:total]
    return out.reshape(orig_shape)


@jax.custom_vjp
def h264_noise(noised_image: jax.Array) -> jax.Array:
    """H264 noise-layer surrogate: value = quantized image, grad = identity."""
    return _h264_quant(noised_image)


def _h264_fwd(x):
    return _h264_quant(x), None


def _h264_bwd(_, g):
    # Straight-through estimator: forward is x + stop_grad(loaded - x) => dy/dx = I.
    return (g,)


h264_noise.defvjp(_h264_fwd, _h264_bwd)


def h264_forward(noised_and_cover):
    """Mirrors H264.forward: replaces element 0 of the list, returns the list."""
    noised_and_cover = list(noised_and_cover)
    noised_and_cover[0] = h264_noise(noised_and_cover[0])
    return noised_and_cover


if __name__ == "__main__":
    key = jax.random.PRNGKey(0)
    k0, k1, k2 = jax.random.split(key, 3)

    # Small NCHW batch (video frames are 3-channel in the original module).
    noised = jax.random.uniform(k0, (2, 3, 16, 16), dtype=jnp.float32,
                                minval=-0.2, maxval=1.2)
    cover = jax.random.uniform(k1, (2, 3, 16, 16), dtype=jnp.float32)

    out = h264_forward([noised, cover])
    result = jax.block_until_ready(out[0])

    # Reference: x + (floor(clip(x,0,1)*255)/255 - x) == floor(clip(x,0,1)*255)/255
    ref = jnp.floor(jnp.clip(noised, 0.0, 1.0) * 255.0) / 255.0
    assert result.shape == noised.shape
    assert result.dtype == noised.dtype
    assert jnp.allclose(result, ref, atol=1e-6)

    # Straight-through gradient must be identity.
    grads = jax.block_until_ready(
        jax.grad(lambda x: jnp.sum(h264_noise(x)))(noised))
    assert jnp.allclose(grads, jnp.ones_like(noised))

    # Odd-sized tensor (size not a multiple of 128) exercises the pad fallback.
    odd = jax.random.uniform(k2, (2, 3, 7, 5), dtype=jnp.float32,
                             minval=-0.2, maxval=1.2)
    odd_out = jax.block_until_ready(h264_noise(odd))
    odd_ref = jnp.floor(jnp.clip(odd, 0.0, 1.0) * 255.0) / 255.0
    assert odd_out.shape == odd.shape
    assert jnp.allclose(odd_out, odd_ref, atol=1e-6)

    print("KERNEL_OK")
</pallas_src>

<mosaic_0001>
module attributes {stable_mosaic.version = 11 : i64} {
  func.func @_h264_quant_kernel(%arg0: i32, %arg1: memref<1x1536xf32, #tpu.memory_space<vmem>>, %arg2: memref<1x1536xf32, #tpu.memory_space<vmem>>) attributes {dimension_semantics = [#tpu.dimension_semantics<parallel>], iteration_bounds = array<i64: 1>, scalar_prefetch = 0 : i64, scratch_operands = 0 : i64, tpu.core_type = #tpu.core_type<tc>, window_params = [{transform_indices = @transform_0, window_bounds = array<i64: 1, 1536>}, {transform_indices = @transform_1, window_bounds = array<i64: 1, 1536>}]} {
    %c0 = arith.constant 0 : index
    %c0_0 = arith.constant 0 : index
    %0 = vector.load %arg1[%c0, %c0_0] : memref<1x1536xf32, #tpu.memory_space<vmem>>, vector<1x1536xf32>
    %cst = arith.constant 0.000000e+00 : f32
    %cst_1 = arith.constant 1.000000e+00 : f32
    %1 = vector.broadcast %cst : f32 to vector<1x1536xf32>
    %2 = arith.maximumf %1, %0 : vector<1x1536xf32>
    %3 = vector.broadcast %cst_1 : f32 to vector<1x1536xf32>
    %4 = arith.minimumf %3, %2 : vector<1x1536xf32>
    %cst_2 = arith.constant 2.550000e+02 : f32
    %5 = vector.broadcast %cst_2 : f32 to vector<1x1536xf32>
    %6 = arith.mulf %4, %5 : vector<1x1536xf32>
    %7 = math.floor %6 : vector<1x1536xf32>
    %cst_3 = arith.constant 0.00392156886 : f32
    %8 = vector.broadcast %cst_3 : f32 to vector<1x1536xf32>
    %9 = arith.mulf %7, %8 : vector<1x1536xf32>
    %c0_4 = arith.constant 0 : index
    %c0_5 = arith.constant 0 : index
    %10 = vector.load %arg2[%c0_4, %c0_5] : memref<1x1536xf32, #tpu.memory_space<vmem>>, vector<1x1536xf32>
    tpu.vector_store %arg2[%c0_4, %c0_5], %9 {strides = array<i32>} : memref<1x1536xf32, #tpu.memory_space<vmem>>, vector<1x1536xf32>,
    return
  }
  func.func @transform_0(%arg0: i32) -> (i32, i32) {
    %c0_i32 = arith.constant 0 : i32
    %c0_i32_0 = arith.constant 0 : i32
    return %arg0, %c0_i32 : i32, i32
  }
  func.func @transform_1(%arg0: i32) -> (i32, i32) {
    %c0_i32 = arith.constant 0 : i32
    %c0_i32_0 = arith.constant 0 : i32
    return %arg0, %c0_i32 : i32, i32
  }
}

</mosaic_0001>

<llo_original>
// kernel: tpu_custom_call.1
$region0: #{tpu_custom_call.1}
  #allocation0 [shape = 'u32[]', space=smem, size = 0x4, offset = 0x4, fixed_abs, tag = 'smem constant byte address 0x4 - core index']
  #allocation1 [shape = 'u32[144,128]{1,0:T(1,128)}', space=vmem, size = 0x12000, scoped, tag = 'internal scratch']
  %s0 = inlined_call_operand.hbm [shape: f32[1,1536], index: 0, kind: input, shape index: {}]
  %s1 = inlined_call_operand.hbm [shape: f32[1,1536], index: 1, kind: output, shape index: {}]
  %s2 = sld [smem:[#allocation0]]
  $region18: #{tpu_custom_call.1} parent=0
    _
  %s4 = ssub.s32 1, %s2
  %s5 = scalar_select 0, %s4, %s2
  $region1: #{tpu_custom_call.1} parent=0
    #allocation2 [shape = 'u8[6144]{0}', space=vmem, size = 0x1800, scoped, tag = 'input window, operand 0, single buffered']
    #allocation3 [shape = 's32[1]{0}', space=sflag, size = 0x4, scoped, tag = 'scoped memory for tpu_custom_call.1']
    #allocation4 [shape = 's32[1]{0}', space=sflag, size = 0x4, scoped, tag = 'scoped memory for tpu_custom_call.1']
    #allocation5 [shape = 'u8[6144]{0}', space=vmem, size = 0x1800, scoped, tag = 'output window, operand 0, single buffered']
    %6 = vsyncpa [#allocation3], 0
    %7 = vsyncpa [#allocation4], 0
    // Predicated region
    $region2: #{tpu_custom_call.1} parent=1 // pred_check
      _
    $region3: #{tpu_custom_call.1} parent=1 // pred_check_branch
      %9 = sbr.rel (0) target = $region5
    $region4: #{tpu_custom_call.1} parent=1 // pred_region
      %s11 = ssub.s32 192, 192
      %12 = vsyncadd [#allocation3], %s11
      %s14 = sshll.u32 [#allocation2], 4
      %s15 = int_to_ptr.vmem [resolvable:$true] %s14
      %17 = dma.hbm_to_vmem [thread:$0]  %s0, 192, %s15, [#allocation3]
    $region5: #{tpu_custom_call.1} parent=1 // pred_fallthru
      _
    // Predicated region
    $region6: #{tpu_custom_call.1} parent=1 // pred_check
      _
    $region7: #{tpu_custom_call.1} parent=1 // pred_check_branch
      %19 = sbr.rel (0) target = $region9
    $region8: #{tpu_custom_call.1} parent=1 // pred_region
      %20 = dma.done [#allocation3], 192
    $region9: #{tpu_custom_call.1} parent=1 // pred_fallthru
      _
    %v21 = vld [vmem:[#allocation2] sm:$0xff]
    %v22 = vld [vmem:[#allocation2 + $0x8] sm:$0xf]
    %v23 = vmax.f32 %v21, 0.0
    %v24 = vmax.f32 %v22, 0.0
    %v25 = vmin.f32 %v23, 1.0
    %v26 = vmin.f32 %v24, 1.0
    %v27 = vmul.f32 %v25, 255.0
    %v28 = vmul.f32 %v26, 255.0
    %v29 = vfloor.f32 %v27
    %v30 = vfloor.f32 %v28
    %v31 = vmul.f32 %v29, 0.003921569
    %v32 = vmul.f32 %v30, 0.003921569
    %33 = vst [vmem:[#allocation5] sm:$0xff] %v31
    %v34 = vlaneseq
    %vm35 = vcmp.ge.s32.totalorder %v34, 0
    %vm36 = vcmp.lt.s32.totalorder %v34, 512
    %vm37 = vmand %vm35, %vm36
    %38 = vst.msk [vmem:[#allocation5 + $0x8] sm:$0xf] %vm37, %v32
    // Predicated region
    $region10: #{tpu_custom_call.1} parent=1 // pred_check
      _
    $region11: #{tpu_custom_call.1} parent=1 // pred_check_branch
      %40 = sbr.rel (0) target = $region13
    $region12: #{tpu_custom_call.1} parent=1 // pred_region
      %s42 = ssub.s32 192, 192
      %43 = vsyncadd [#allocation4], %s42
      %s45 = sshll.u32 [#allocation5], 4
      %s46 = int_to_ptr.vmem [resolvable:$true] %s45
      %48 = dma.vmem_to_hbm [thread:$0]  %s46, 192, %s1, [#allocation4]
    $region13: #{tpu_custom_call.1} parent=1 // pred_fallthru
      _
    // Predicated region
    $region14: #{tpu_custom_call.1} parent=1 // pred_check
      _
    $region15: #{tpu_custom_call.1} parent=1 // pred_check_branch
      %50 = sbr.rel (0) target = $region17
    $region16: #{tpu_custom_call.1} parent=1 // pred_region
      %51 = dma.done [#allocation4], 192
    $region17: #{tpu_custom_call.1} parent=1 // pred_fallthru
      _
    %52 = vsyncpa [#allocation3], 1
    %53 = vsyncpa [#allocation4], 1

</llo_original>
